<compile_context>
chip_gen: v7x
topology: tpu7x:2x2x1
jax: 0.10.0
libtpu: 0.0.40
codegen_flags: <defaults>
</compile_context>

<pallas_src>
import jax
import jax.numpy as jnp
from jax import lax
from jax.experimental import pallas as pl
from jax.experimental.pallas import tpu as pltpu

_LANE = 128


def _round_up(x, m):
    return (x + m - 1) // m * m


def _fast_onedim_conv_kernel(x_ref, w_ref, o_ref):
    """x_ref: [bm, W] folded-row tile, w_ref: [G, W], o_ref: [G, bm].

    Contract over the W (lane-minor) dim of both operands — the standard q @ k.T
    pattern the MXU lowers natively — producing a lane-dense [G, bm] tile written
    with unmasked full-width stores.  Accumulate in f32.
    """
    acc = lax.dot_general(
        w_ref[...], x_ref[...],
        dimension_numbers=(((1,), (1,)), ((), ())),
        preferred_element_type=jnp.float32,
    )
    o_ref[...] = acc.astype(o_ref.dtype)


def _choose_block_rows(mf, width, itemsize, *, target_step_bytes,
                       vmem_in_budget_bytes, min_steps, min_step_bytes):
    """Rows of the folded [Mf, width] input per grid step.

    * multiple of 128 (keeps the [G, bm] output block lane-dense / unmasked),
    * sized to ~target_step_bytes of HBM traffic per step (amortise the ~0.35 us
      per-grid-step overhead; a mem-bound reduction needs >= 1-4 MiB per step),
    * capped so the double-buffered, lane-PADDED input tile fits the VMEM budget
      (a (bm, width) block occupies bm * round_up(width, 128) * itemsize in VMEM),
    * softly capped so large problems still expose >= min_steps grid steps for
      pipelining / 2-TensorCore sharding — but never below ~min_step_bytes/step.
    """
    row_hbm_bytes = width * itemsize
    row_vmem_bytes = _round_up(width, _LANE) * itemsize

    bm = max(1, target_step_bytes // row_hbm_bytes)
    bm = min(bm, max(1, vmem_in_budget_bytes // (2 * row_vmem_bytes)))
    bm = max(_LANE, (bm // _LANE) * _LANE)

    floor_rows = _round_up(max(1, min_step_bytes // row_hbm_bytes), _LANE)
    steps_cap = (mf // min_steps) // _LANE * _LANE
    if steps_cap >= floor_rows:
        bm = min(bm, steps_cap)

    # Never larger than the (lane-rounded) problem itself.
    bm = min(bm, _round_up(max(mf, 1), _LANE))
    return bm


def fast_one_dim_convolution_forward(
    feat, weight, *,
    target_step_bytes=4 << 20,       # ~4 MiB of HBM read per grid step
    vmem_in_budget_bytes=24 << 20,   # budget for the double-buffered input tiles
):
    """FastOneDimConvolution forward: (feat @ weight).squeeze(2).

    feat: [N, D, K], weight: [K, 1]  ->  [N, D]  with out[n,d] = sum_k feat[n,d,k] * w[k].
    """
    N, D, K = feat.shape
    assert weight.shape == (K, 1)
    M = N * D
    itemsize = jnp.dtype(feat.dtype).itemsize

    # ---- Fold K into the lane dimension --------------------------------------
    # A [bm, K] block with K=32 would be padded to 128 lanes in VMEM (4x waste) and
    # move only K*itemsize useful bytes per row.  Folding G = 128//K consecutive rows
    # into one G*K-wide row makes the block lane-dense: 4x more HBM bytes per step for
    # the same VMEM footprint and a 128-wide MXU contraction.
    G = max(1, _LANE // K) if K <= _LANE else 1
    if M % G != 0:
        G = 1                                      # correctness fallback for odd M
    Mf = M // G
    w_width = G * K

    x_fold = feat.reshape(Mf, w_width)             # free row-major reshape
    w_flat = weight.reshape(K).astype(feat.dtype)
    # Block-diagonal replication: w_fold[g, g*K + k] = w[k], zeros elsewhere, so the
    # folded-width contraction reproduces the per-original-row reduction over K.
    w_fold = jnp.kron(jnp.eye(G, dtype=feat.dtype), w_flat[None, :])   # [G, G*K]

    bm = _choose_block_rows(
        Mf, w_width, itemsize,
        target_step_bytes=target_step_bytes,
        vmem_in_budget_bytes=vmem_in_budget_bytes,
        min_steps=16,                 # >= 8 steps per TensorCore under megacore sharding
        min_step_bytes=1 << 20,
    )
    grid = (pl.cdiv(Mf, bm),)         # ragged last block: OOB reads only feed OOB
                                      # (discarded) output columns — safe per-column dep.

    cost = pl.CostEstimate(
        flops=2 * M * K,
        transcendentals=0,
        bytes_accessed=M * K * itemsize + K * itemsize + M * itemsize,
    )

    out_fold = pl.pallas_call(
        _fast_onedim_conv_kernel,
        out_shape=jax.ShapeDtypeStruct((G, Mf), feat.dtype),
        grid=grid,
        in_specs=[
            pl.BlockSpec((bm, w_width), lambda i: (i, 0)),   # contiguous HBM row tiles
            pl.BlockSpec((G, w_width), lambda i: (0, 0)),    # constant block: no re-DMA
        ],
        out_specs=pl.BlockSpec((G, bm), lambda i: (0, i)),   # lane-dense, contiguous rows
        compiler_params=pltpu.CompilerParams(
            dimension_semantics=("parallel",),               # 2-TC sharding on v7x
            vmem_limit_bytes=32 << 20,                       # headroom over v5e's 16 MiB default
        ),
        cost_estimate=cost,
    )(x_fold, w_fold)

    # Un-fold: out_fold[g, m'] = out[m'*G + g].  Transpose+reshape of an array K times
    # smaller than the input — cheap wrapper-side plumbing (no-op when G == 1).
    return out_fold.T.reshape(N, D)


def _reference(feat, weight):
    # Exactly the PyTorch forward: (feat @ w).squeeze(dim=2).
    return jnp.squeeze(feat @ weight, axis=2)


if __name__ == "__main__":
    num_subgraphs, prop_steps = 4, 8
    K = num_subgraphs * prop_steps     # 32

    key = jax.random.PRNGKey(0)
    kx1, kx2, kx3, kw = jax.random.split(key, 4)
    # The module initialises the learnable weight to ones; use a deterministic random
    # weight so the check exercises a non-trivial reduction.
    weight = jax.random.uniform(kw, (K, 1), jnp.float32, -1.0, 1.0)

    # 1) Main small case (folded path, lane-aligned).
    feat = jax.random.normal(kx1, (4, 512, K), jnp.float32)
    out = jax.block_until_ready(fast_one_dim_convolution_forward(feat, weight))
    assert out.shape == (4, 512)
    assert jnp.allclose(out, _reference(feat, weight), atol=1e-5, rtol=1e-5)

    # 2) Ragged Mf (folded path, masked last block).
    feat_r = jax.random.normal(kx2, (3, 160, K), jnp.float32)
    out_r = jax.block_until_ready(fast_one_dim_convolution_forward(feat_r, weight))
    assert jnp.allclose(out_r, _reference(feat_r, weight), atol=1e-5, rtol=1e-5)

    # 3) M not divisible by the fold factor -> G=1 fallback path.
    feat_o = jax.random.normal(kx3, (3, 171, K), jnp.float32)
    out_o = jax.block_until_ready(fast_one_dim_convolution_forward(feat_o, weight))
    assert jnp.allclose(out_o, _reference(feat_o, weight), atol=1e-5, rtol=1e-5)

    print("KERNEL_OK")
</pallas_src>

<mosaic_0001>
module attributes {stable_mosaic.version = 11 : i64} {
  func.func @_fast_onedim_conv_kernel(%arg0: i32, %arg1: memref<512x128xf32, #tpu.memory_space<vmem>>, %arg2: memref<4x128xf32, #tpu.memory_space<vmem>>, %arg3: memref<4x512xf32, #tpu.memory_space<vmem>>) attributes {dimension_semantics = [#tpu.dimension_semantics<parallel>], iteration_bounds = array<i64: 1>, scalar_prefetch = 0 : i64, scratch_operands = 0 : i64, tpu.core_type = #tpu.core_type<tc>, window_params = [{transform_indices = @transform_0, window_bounds = array<i64: 512, 128>}, {pipeline_mode = #tpu.pipeline_mode<synchronous>, transform_indices = @transform_1, window_bounds = array<i64: 4, 128>}, {transform_indices = @transform_2, window_bounds = array<i64: 4, 512>}]} {
    %c0 = arith.constant 0 : index
    %c0_0 = arith.constant 0 : index
    %0 = vector.load %arg2[%c0, %c0_0] : memref<4x128xf32, #tpu.memory_space<vmem>>, vector<4x128xf32>
    %c0_1 = arith.constant 0 : index
    %c0_2 = arith.constant 0 : index
    %1 = vector.load %arg1[%c0_1, %c0_2] : memref<512x128xf32, #tpu.memory_space<vmem>>, vector<512x128xf32>
    %cst = arith.constant dense<0.000000e+00> : vector<4x512xf32>
    %2 = tpu.matmul %0, %1, %cst {dimension_numbers = #tpu.dot_dimension_numbers<[1], [1], [0], [0], [0, 0, 1, 0], [], []>} : vector<4x128xf32>, vector<512x128xf32>, vector<4x512xf32> -> vector<4x512xf32>
    %c0_3 = arith.constant 0 : index
    %c0_4 = arith.constant 0 : index
    %3 = vector.load %arg3[%c0_3, %c0_4] : memref<4x512xf32, #tpu.memory_space<vmem>>, vector<4x512xf32>
    tpu.vector_store %arg3[%c0_3, %c0_4], %2 {strides = array<i32>} : memref<4x512xf32, #tpu.memory_space<vmem>>, vector<4x512xf32>,
    return
  }
  func.func @transform_0(%arg0: i32) -> (i32, i32) {
    %c0_i32 = arith.constant 0 : i32
    %c0_i32_0 = arith.constant 0 : i32
    return %arg0, %c0_i32 : i32, i32
  }
  func.func @transform_1(%arg0: i32) -> (i32, i32) {
    %c0_i32 = arith.constant 0 : i32
    %c0_i32_0 = arith.constant 0 : i32
    %c0_i32_1 = arith.constant 0 : i32
    return %c0_i32, %c0_i32_0 : i32, i32
  }
  func.func @transform_2(%arg0: i32) -> (i32, i32) {
    %c0_i32 = arith.constant 0 : i32
    %c0_i32_0 = arith.constant 0 : i32
    return %c0_i32, %arg0 : i32, i32
  }
}

</mosaic_0001>

<llo_original>
// kernel: tpu_custom_call.1
$region0: #{tpu_custom_call.1}
  #allocation0 [shape = 'u32[]', space=smem, size = 0x4, offset = 0x4, fixed_abs, tag = 'smem constant byte address 0x4 - core index']
  #allocation1 [shape = 'u32[144,128]{1,0:T(1,128)}', space=vmem, size = 0x12000, scoped, tag = 'internal scratch']
  %s0 = inlined_call_operand.hbm [shape: f32[512,128], index: 0, kind: input, shape index: {}]
  %s1 = inlined_call_operand.hbm [shape: f32[4,128], index: 1, kind: input, shape index: {}]
  %s2 = inlined_call_operand.hbm [shape: f32[4,512], index: 2, kind: output, shape index: {}]
  %s3 = sld [smem:[#allocation0]]
  $region26: #{tpu_custom_call.1} parent=0
    _
  %s5 = ssub.s32 1, %s3
  %s6 = scalar_select 0, %s5, %s3
  $region1: #{tpu_custom_call.1} parent=0
    #allocation2 [shape = 'u8[262144]{0}', space=vmem, size = 0x40000, scoped, tag = 'input window, operand 0, single buffered']
    #allocation3 [shape = 's32[1]{0}', space=sflag, size = 0x4, scoped, tag = 'scoped memory for tpu_custom_call.1']
    #allocation4 [shape = 's32[1]{0}', space=sflag, size = 0x4, scoped, tag = 'scoped memory for tpu_custom_call.1']
    #allocation5 [shape = 'u8[2048]{0}', space=vmem, size = 0x800, scoped, tag = 'input window, operand 1, single buffered']
    #allocation6 [shape = 's32[1]{0}', space=sflag, size = 0x4, scoped, tag = 'scoped memory for tpu_custom_call.1']
    #allocation7 [shape = 'u8[8192]{0}', space=vmem, size = 0x2000, scoped, tag = 'output window, operand 0, single buffered']
    %7 = vsyncpa [#allocation3], 0
    %8 = vsyncpa [#allocation6], 0
    %9 = vsyncpa [#allocation4], 0
    // Predicated region
    $region2: #{tpu_custom_call.1} parent=1 // pred_check
      _
    $region3: #{tpu_custom_call.1} parent=1 // pred_check_branch
      %11 = sbr.rel (0) target = $region5
    $region4: #{tpu_custom_call.1} parent=1 // pred_region
      %s13 = ssub.s32 8192, 8192
      %14 = vsyncadd [#allocation3], %s13
      %s15 = sshll.u32 [#allocation2], 4
      %s16 = int_to_ptr.vmem [resolvable:$true] %s15
      %21 = dma.hbm_to_vmem [thread:$0]  %s0, 8192, %s16, [#allocation3], 128, 128, 8
    $region5: #{tpu_custom_call.1} parent=1 // pred_fallthru
      _
    // Predicated region
    $region6: #{tpu_custom_call.1} parent=1 // pred_check
      _
    $region7: #{tpu_custom_call.1} parent=1 // pred_check_branch
      %23 = sbr.rel (0) target = $region9
    $region8: #{tpu_custom_call.1} parent=1 // pred_region
      %s25 = ssub.s32 64, 64
      %26 = vsyncadd [#allocation6], %s25
      %s28 = sshll.u32 [#allocation5], 4
      %s29 = int_to_ptr.vmem [resolvable:$true] %s28
      %31 = dma.hbm_to_vmem [thread:$0]  %s1, 64, %s29, [#allocation6]
    $region9: #{tpu_custom_call.1} parent=1 // pred_fallthru
      _
    // Predicated region
    $region10: #{tpu_custom_call.1} parent=1 // pred_check
      _
    $region11: #{tpu_custom_call.1} parent=1 // pred_check_branch
      %33 = sbr.rel (0) target = $region13
    $region12: #{tpu_custom_call.1} parent=1 // pred_region
      %34 = dma.done [#allocation3], 8192
    $region13: #{tpu_custom_call.1} parent=1 // pred_fallthru
      _
    // Predicated region
    $region14: #{tpu_custom_call.1} parent=1 // pred_check
      _
    $region15: #{tpu_custom_call.1} parent=1 // pred_check_branch
      %36 = sbr.rel (0) target = $region17
    $region16: #{tpu_custom_call.1} parent=1 // pred_region
      %37 = dma.done [#allocation6], 64
    $region17: #{tpu_custom_call.1} parent=1 // pred_fallthru
      _
    %v38 = vld [vmem:[#allocation5] sm:$0xf]
    %v39 = vld [vmem:[#allocation2] sm:$0xff]
    %v40 = vld [vmem:[#allocation2 + $0x8] sm:$0xff]
    %v41 = vld [vmem:[#allocation2 + $0x10] sm:$0xff]
    %v42 = vld [vmem:[#allocation2 + $0x18] sm:$0xff]
    %v43 = vld [vmem:[#allocation2 + $0x20] sm:$0xff]
    %v44 = vld [vmem:[#allocation2 + $0x28] sm:$0xff]
    %v45 = vld [vmem:[#allocation2 + $0x30] sm:$0xff]
    %v46 = vld [vmem:[#allocation2 + $0x38] sm:$0xff]
    %v47 = vld [vmem:[#allocation2 + $0x40] sm:$0xff]
    %v48 = vld [vmem:[#allocation2 + $0x48] sm:$0xff]
    %v49 = vld [vmem:[#allocation2 + $0x50] sm:$0xff]
    %v50 = vld [vmem:[#allocation2 + $0x58] sm:$0xff]
    %v51 = vld [vmem:[#allocation2 + $0x60] sm:$0xff]
    %v52 = vld [vmem:[#allocation2 + $0x68] sm:$0xff]
    %v53 = vld [vmem:[#allocation2 + $0x70] sm:$0xff]
    %v54 = vld [vmem:[#allocation2 + $0x78] sm:$0xff]
    %v55 = vld [vmem:[#allocation2 + $0x80] sm:$0xff]
    %v56 = vld [vmem:[#allocation2 + $0x88] sm:$0xff]
    %v57 = vld [vmem:[#allocation2 + $0x90] sm:$0xff]
    %v58 = vld [vmem:[#allocation2 + $0x98] sm:$0xff]
    %v59 = vld [vmem:[#allocation2 + $0xa0] sm:$0xff]
    %v60 = vld [vmem:[#allocation2 + $0xa8] sm:$0xff]
    %v61 = vld [vmem:[#allocation2 + $0xb0] sm:$0xff]
    %v62 = vld [vmem:[#allocation2 + $0xb8] sm:$0xff]
    %v63 = vld [vmem:[#allocation2 + $0xc0] sm:$0xff]
    %v64 = vld [vmem:[#allocation2 + $0xc8] sm:$0xff]
    %v65 = vld [vmem:[#allocation2 + $0xd0] sm:$0xff]
    %v66 = vld [vmem:[#allocation2 + $0xd8] sm:$0xff]
    %v67 = vld [vmem:[#allocation2 + $0xe0] sm:$0xff]
    %v68 = vld [vmem:[#allocation2 + $0xe8] sm:$0xff]
    %v69 = vld [vmem:[#allocation2 + $0xf0] sm:$0xff]
    %v70 = vld [vmem:[#allocation2 + $0xf8] sm:$0xff]
    %v71 = vld [vmem:[#allocation2 + $0x100] sm:$0xff]
    %v72 = vld [vmem:[#allocation2 + $0x108] sm:$0xff]
    %v73 = vld [vmem:[#allocation2 + $0x110] sm:$0xff]
    %v74 = vld [vmem:[#allocation2 + $0x118] sm:$0xff]
    %v75 = vld [vmem:[#allocation2 + $0x120] sm:$0xff]
    %v76 = vld [vmem:[#allocation2 + $0x128] sm:$0xff]
    %v77 = vld [vmem:[#allocation2 + $0x130] sm:$0xff]
    %v78 = vld [vmem:[#allocation2 + $0x138] sm:$0xff]
    %v79 = vld [vmem:[#allocation2 + $0x140] sm:$0xff]
    %v80 = vld [vmem:[#allocation2 + $0x148] sm:$0xff]
    %v81 = vld [vmem:[#allocation2 + $0x150] sm:$0xff]
    %v82 = vld [vmem:[#allocation2 + $0x158] sm:$0xff]
    %v83 = vld [vmem:[#allocation2 + $0x160] sm:$0xff]
    %v84 = vld [vmem:[#allocation2 + $0x168] sm:$0xff]
    %v85 = vld [vmem:[#allocation2 + $0x170] sm:$0xff]
    %v86 = vld [vmem:[#allocation2 + $0x178] sm:$0xff]
    %v87 = vld [vmem:[#allocation2 + $0x180] sm:$0xff]
    %v88 = vld [vmem:[#allocation2 + $0x188] sm:$0xff]
    %v89 = vld [vmem:[#allocation2 + $0x190] sm:$0xff]
    %v90 = vld [vmem:[#allocation2 + $0x198] sm:$0xff]
    %v91 = vld [vmem:[#allocation2 + $0x1a0] sm:$0xff]
    %v92 = vld [vmem:[#allocation2 + $0x1a8] sm:$0xff]
    %v93 = vld [vmem:[#allocation2 + $0x1b0] sm:$0xff]
    %v94 = vld [vmem:[#allocation2 + $0x1b8] sm:$0xff]
    %v95 = vld [vmem:[#allocation2 + $0x1c0] sm:$0xff]
    %v96 = vld [vmem:[#allocation2 + $0x1c8] sm:$0xff]
    %v97 = vld [vmem:[#allocation2 + $0x1d0] sm:$0xff]
    %v98 = vld [vmem:[#allocation2 + $0x1d8] sm:$0xff]
    %v99 = vld [vmem:[#allocation2 + $0x1e0] sm:$0xff]
    %v100 = vld [vmem:[#allocation2 + $0x1e8] sm:$0xff]
    %v101 = vld [vmem:[#allocation2 + $0x1f0] sm:$0xff]
    %v102 = vld [vmem:[#allocation2 + $0x1f8] sm:$0xff]
    %103 = vmatprep.subr.mxu0 0.0
    %104 = vmatpush1.xpose.msra.mxu0 %v39
    %105 = vmatprep.subr.mxu0 0.0
    %106 = vmatpush1.xpose.msra.mxu0 %v40
    %107 = vmatprep.subr.mxu0 0.0
    %108 = vmatpush1.xpose.msra.mxu0 %v41
    %109 = vmatprep.subr.mxu0 0.0
    %110 = vmatpush1.xpose.msra.mxu0 %v42
    %111 = vmatprep.subr.mxu0 0.0
    %112 = vmatpush1.xpose.msra.mxu0 %v43
    %113 = vmatprep.subr.mxu0 0.0
    %114 = vmatpush1.xpose.msra.mxu0 %v44
    %115 = vmatprep.subr.mxu0 0.0
    %116 = vmatpush1.xpose.msra.mxu0 %v45
    %117 = vmatprep.subr.mxu0 0.0
    %118 = vmatpush1.xpose.msra.mxu0 %v46
    %119 = vmatprep.subr.mxu0 0.0
    %120 = vmatpush1.xpose.msra.mxu0 %v47
    %121 = vmatprep.subr.mxu0 0.0
    %122 = vmatpush1.xpose.msra.mxu0 %v48
    %123 = vmatprep.subr.mxu0 0.0
    %124 = vmatpush1.xpose.msra.mxu0 %v49
    %125 = vmatprep.subr.mxu0 0.0
    %126 = vmatpush1.xpose.msra.mxu0 %v50
    %127 = vmatprep.subr.mxu0 0.0
    %128 = vmatpush1.xpose.msra.mxu0 %v51
    %129 = vmatprep.subr.mxu0 0.0
    %130 = vmatpush1.xpose.msra.mxu0 %v52
    %131 = vmatprep.subr.mxu0 0.0
    %132 = vmatpush1.xpose.msra.mxu0 %v53
    %133 = vmatprep.subr.mxu0 0.0
    %134 = vmatpush1.xpose.msra.mxu0 %v54
    %135 = vmatprep.subr.mxu0 0.0
    %136 = vmatpush1.xpose.msra.mxu0 %v55
    %137 = vmatprep.subr.mxu0 0.0
    %138 = vmatpush1.xpose.msra.mxu0 %v56
    %139 = vmatprep.subr.mxu0 0.0
    %140 = vmatpush1.xpose.msra.mxu0 %v57
    %141 = vmatprep.subr.mxu0 0.0
    %142 = vmatpush1.xpose.msra.mxu0 %v58
    %143 = vmatprep.subr.mxu0 0.0
    %144 = vmatpush1.xpose.msra.mxu0 %v59
    %145 = vmatprep.subr.mxu0 0.0
    %146 = vmatpush1.xpose.msra.mxu0 %v60
    %147 = vmatprep.subr.mxu0 0.0
    %148 = vmatpush1.xpose.msra.mxu0 %v61
    %149 = vmatprep.subr.mxu0 0.0
    %150 = vmatpush1.xpose.msra.mxu0 %v62
    %151 = vmatprep.subr.mxu0 0.0
    %152 = vmatpush1.xpose.msra.mxu0 %v63
    %153 = vmatprep.subr.mxu0 0.0
    %154 = vmatpush1.xpose.msra.mxu0 %v64
    %155 = vmatprep.subr.mxu0 0.0
    %156 = vmatpush1.xpose.msra.mxu0 %v65
    %157 = vmatprep.subr.mxu0 0.0
    %158 = vmatpush1.xpose.msra.mxu0 %v66
    %159 = vmatprep.subr.mxu0 0.0
    %160 = vmatpush1.xpose.msra.mxu0 %v67
    %161 = vmatprep.subr.mxu0 0.0
    %162 = vmatpush1.xpose.msra.mxu0 %v68
    %163 = vmatprep.subr.mxu0 0.0
    %164 = vmatpush1.xpose.msra.mxu0 %v69
    %165 = vmatprep.subr.mxu0 0.0
    %166 = vmatpush1.xpose.msra.mxu0 %v70
    %167 = vmatprep.mubr.f32.mxu0 0.0
    %168 = vmatmul.mubr.f32.gmra.mrb[0].mxu0 %v38
    %v169 = vpop.f32.mrb[0].mxu0
    %v170 = vadd.f32 0.0, %v169
    %v171 = vpop.f32.mrb[0].mxu0
    %v172 = vadd.f32 0.0, %v171
    %173 = vdwg.mxu0
    %174 = vmatprep.subr.mxu0 0.0
    %175 = vmatpush1.xpose.msra.mxu0 %v71
    %176 = vmatprep.subr.mxu0 0.0
    %177 = vmatpush1.xpose.msra.mxu0 %v72
    %178 = vmatprep.subr.mxu0 0.0
    %179 = vmatpush1.xpose.msra.mxu0 %v73
    %180 = vmatprep.subr.mxu0 0.0
    %181 = vmatpush1.xpose.msra.mxu0 %v74
    %182 = vmatprep.subr.mxu0 0.0
    %183 = vmatpush1.xpose.msra.mxu0 %v75
    %184 = vmatprep.subr.mxu0 0.0
    %185 = vmatpush1.xpose.msra.mxu0 %v76
    %186 = vmatprep.subr.mxu0 0.0
    %187 = vmatpush1.xpose.msra.mxu0 %v77
    %188 = vmatprep.subr.mxu0 0.0
    %189 = vmatpush1.xpose.msra.mxu0 %v78
    %190 = vmatprep.subr.mxu0 0.0
    %191 = vmatpush1.xpose.msra.mxu0 %v79
    %192 = vmatprep.subr.mxu0 0.0
    %193 = vmatpush1.xpose.msra.mxu0 %v80
    %194 = vmatprep.subr.mxu0 0.0
    %195 = vmatpush1.xpose.msra.mxu0 %v81
    %196 = vmatprep.subr.mxu0 0.0
    %197 = vmatpush1.xpose.msra.mxu0 %v82
    %198 = vmatprep.subr.mxu0 0.0
    %199 = vmatpush1.xpose.msra.mxu0 %v83
    %200 = vmatprep.subr.mxu0 0.0
    %201 = vmatpush1.xpose.msra.mxu0 %v84
    %202 = vmatprep.subr.mxu0 0.0
    %203 = vmatpush1.xpose.msra.mxu0 %v85
    %204 = vmatprep.subr.mxu0 0.0
    %205 = vmatpush1.xpose.msra.mxu0 %v86
    %206 = vmatprep.subr.mxu0 0.0
    %207 = vmatpush1.xpose.msra.mxu0 %v87
    %208 = vmatprep.subr.mxu0 0.0
    %209 = vmatpush1.xpose.msra.mxu0 %v88
    %210 = vmatprep.subr.mxu0 0.0
    %211 = vmatpush1.xpose.msra.mxu0 %v89
    %212 = vmatprep.subr.mxu0 0.0
    %213 = vmatpush1.xpose.msra.mxu0 %v90
    %214 = vmatprep.subr.mxu0 0.0
    %215 = vmatpush1.xpose.msra.mxu0 %v91
    %216 = vmatprep.subr.mxu0 0.0
    %217 = vmatpush1.xpose.msra.mxu0 %v92
    %218 = vmatprep.subr.mxu0 0.0
    %219 = vmatpush1.xpose.msra.mxu0 %v93
    %220 = vmatprep.subr.mxu0 0.0
    %221 = vmatpush1.xpose.msra.mxu0 %v94
    %222 = vmatprep.subr.mxu0 0.0
    %223 = vmatpush1.xpose.msra.mxu0 %v95
    %224 = vmatprep.subr.mxu0 0.0
    %225 = vmatpush1.xpose.msra.mxu0 %v96
    %226 = vmatprep.subr.mxu0 0.0
    %227 = vmatpush1.xpose.msra.mxu0 %v97
    %228 = vmatprep.subr.mxu0 0.0
    %229 = vmatpush1.xpose.msra.mxu0 %v98
    %230 = vmatprep.subr.mxu0 0.0
    %231 = vmatpush1.xpose.msra.mxu0 %v99
    %232 = vmatprep.subr.mxu0 0.0
    %233 = vmatpush1.xpose.msra.mxu0 %v100
    %234 = vmatprep.subr.mxu0 0.0
    %235 = vmatpush1.xpose.msra.mxu0 %v101
    %236 = vmatprep.subr.mxu0 0.0
    %237 = vmatpush1.xpose.msra.mxu0 %v102
    %238 = vmatprep.mubr.f32.mxu0 0.0
    %239 = vmatmul.mubr.f32.gmra.mrb[0].mxu0 %v38
    %v240 = vpop.f32.mrb[0].mxu0
    %v241 = vadd.f32 0.0, %v240
    %v242 = vpop.f32.mrb[0].mxu0
    %v243 = vadd.f32 0.0, %v242
    %244 = vdwg.mxu0
    %v249 = vcombine.low %v170, %v172
    %v250 = vcombine.low %v241, %v243
    %253 = vst [vmem:[#allocation7] sm:$0xff] %v249
    %254 = vst [vmem:[#allocation7 + $0x8] sm:$0xff] %v250
    // Predicated region
    $region18: #{tpu_custom_call.1} parent=1 // pred_check
      _
    $region19: #{tpu_custom_call.1} parent=1 // pred_check_branch
      %256 = sbr.rel (0) target = $region21
    $region20: #{tpu_custom_call.1} parent=1 // pred_region
      %s258 = ssub.s32 256, 256
      %259 = vsyncadd [#allocation4], %s258
      %s261 = sshll.u32 [#allocation7], 4
      %s262 = int_to_ptr.vmem [resolvable:$true] %s261
      %264 = dma.vmem_to_hbm [thread:$0]  %s262, 256, %s2, [#allocation4]
    $region21: #{tpu_custom_call.1} parent=1 // pred_fallthru
      _
    // Predicated region
    $region22: #{tpu_custom_call.1} parent=1 // pred_check
      _
    $region23: #{tpu_custom_call.1} parent=1 // pred_check_branch
      %266 = sbr.rel (0) target = $region25
    $region24: #{tpu_custom_call.1} parent=1 // pred_region
      %267 = dma.done [#allocation4], 256
    $region25: #{tpu_custom_call.1} parent=1 // pred_fallthru
      _
    %268 = vsyncpa [#allocation3], 1
    %269 = vsyncpa [#allocation6], 1
    %270 = vsyncpa [#allocation4], 1

</llo_original>
